<compile_context>
chip_gen: v6e
topology: v6e:2x2x1
jax: 0.10.0
libtpu: 0.0.40
codegen_flags: <defaults>
</compile_context>

<pallas_src>
import jax
import jax.numpy as jnp
from jax.experimental import pallas as pl
from jax.experimental.pallas import tpu as pltpu

_LANE = 128


def _vmem_capacity_bytes():
    # Generation-aware VMEM capacity (v5e/v6e: 128 MiB, v7x: 64 MiB).
    try:
        return int(pltpu.get_tpu_info().vmem_capacity_bytes)
    except Exception:
        return 64 * 1024 * 1024  # conservative fallback (v7x-sized)


def _make_vpu_kernel(c_in, c_out):
    # Tiny channel counts: the MXU would be <1% utilized; use scalar*vector
    # FMAs on the VPU (which has huge slack in this mem-bound kernel).
    def kernel(x_ref, w_ref, b_ref, o_ref):
        # x_ref: (BN, C_in, THW) VMEM tile (native dtype)
        # w_ref: (C_out, C_in) SMEM, b_ref: (C_out,) SMEM (f32 scalars)
        bn, _, thw = x_ref.shape
        # Hoist per-channel loads/casts out of the C_out loop.
        xs = [x_ref[:, c, :].astype(jnp.float32) for c in range(c_in)]
        for o in range(c_out):
            acc = jnp.full((bn, thw), b_ref[o], dtype=jnp.float32)
            for c in range(c_in):
                acc = acc + w_ref[o, c] * xs[c]
            o_ref[:, o, :] = acc.astype(o_ref.dtype)

    return kernel


def _make_mxu_kernel(bn):
    # General channel counts: MXU matmul, native-dtype operands, f32 accum.
    # TODO(synk): for very large C_in/C_out, tile the channel axes in the grid
    # with a K-loop accumulator instead of keeping the full weight resident.
    def kernel(x_ref, w_ref, b_ref, o_ref):
        # x_ref: (BN, C_in, THW), w_ref: (C_out, C_in), b_ref: (C_out, 1) f32
        w = w_ref[...]
        b = b_ref[...]
        for i in range(bn):  # static, small
            acc = jax.lax.dot_general(
                w, x_ref[i],
                dimension_numbers=(((1,), (0,)), ((), ())),
                preferred_element_type=jnp.float32,
            ) + b
            o_ref[i] = acc.astype(o_ref.dtype)

    return kernel


def outconv_forward(x_nchw, weight, bias, *,
                    target_input_tile_bytes=4 * 1024 * 1024):
    """1x1 conv forward (nn.Conv2d(kernel_size=1) semantics).

    x_nchw : (N, C_in, H, W)
    weight : (C_out, C_in, 1, 1)   (PyTorch Conv2d layout)
    bias   : (C_out,)
    returns: (N, C_out, H, W)
    """
    N, C_in, H, W = x_nchw.shape
    C_out = weight.shape[0]
    dtype = x_nchw.dtype
    itemsize = jnp.dtype(dtype).itemsize  # real itemsize (no eager f32 copy)
    hw = H * W

    # ---- generation-aware VMEM budgeting -----------------------------------
    vmem_cap = _vmem_capacity_bytes()
    vmem_limit = min((vmem_cap * 3) // 4, vmem_cap - 8 * 1024 * 1024)
    tile_budget = (vmem_limit * 4) // 5

    # Bytes per output column of work: double-buffered in+out tiles plus f32
    # intermediates inside the kernel body.
    per_elem_bytes = 2 * (C_in + C_out) * itemsize + 4 * (C_in + C_out)
    max_elems_vmem = max(_LANE, tile_budget // per_elem_bytes)
    target_elems = max(_LANE, target_input_tile_bytes // max(1, C_in * itemsize))
    elems = min(max_elems_vmem, target_elems)  # elements (= bn * thw) per step

    # ---- tile selection -----------------------------------------------------
    if hw <= elems:
        # Small images: cover the whole H*W in one block (block dim == full
        # array dim, so no 128-alignment requirement) and fold batch rows in
        # so each grid step moves MiBs instead of tens of KiBs.
        thw = hw
        bn = max(1, min(N, elems // hw))
        if N >= 2:
            # keep >= 2 parallel grid steps so v7x's 2nd TensorCore has work
            bn = min(bn, max(1, -(-N // 2)))
        grid = (pl.cdiv(N, bn), 1)
    else:
        # Large images: one batch row per step, big lane-dense spatial tiles.
        # Ragged final tiles are clipped by Pallas (OOB writes dropped).
        bn = 1
        thw = max(_LANE, (elems // _LANE) * _LANE)
        grid = (N, pl.cdiv(hw, thw))

    # ---- glue: pure reshapes, no transposes, no padding ---------------------
    x3 = x_nchw.reshape(N, C_in, hw)
    w_mat = weight.reshape(C_out, C_in).astype(dtype)

    use_vpu = (C_in <= 8) and (C_out <= 8)
    if use_vpu:
        kernel = _make_vpu_kernel(C_in, C_out)
        w_arg = w_mat                                   # (C_out, C_in) -> SMEM
        b_arg = bias.astype(jnp.float32)                # (C_out,)      -> SMEM
        w_spec = pl.BlockSpec(memory_space=pltpu.MemorySpace.SMEM)
        b_spec = pl.BlockSpec(memory_space=pltpu.MemorySpace.SMEM)
    else:
        kernel = _make_mxu_kernel(bn)
        w_arg = w_mat                                   # (C_out, C_in) -> VMEM
        b_arg = bias.reshape(C_out, 1).astype(jnp.float32)
        w_spec = pl.BlockSpec((C_out, C_in), lambda i, s: (0, 0))
        b_spec = pl.BlockSpec((C_out, 1), lambda i, s: (0, 0))

    flops = 2 * N * hw * C_in * C_out
    bytes_accessed = (N * (C_in + C_out) * hw) * itemsize \
        + int(w_arg.size) * int(jnp.dtype(w_arg.dtype).itemsize) \
        + int(b_arg.size) * 4

    out3 = pl.pallas_call(
        kernel,
        out_shape=jax.ShapeDtypeStruct((N, C_out, hw), dtype),
        grid=grid,
        in_specs=[
            pl.BlockSpec((bn, C_in, thw), lambda i, s: (i, 0, s)),  # x tile
            w_spec,                                                  # weight
            b_spec,                                                  # bias
        ],
        out_specs=pl.BlockSpec((bn, C_out, thw), lambda i, s: (i, 0, s)),
        compiler_params=pltpu.CompilerParams(
            dimension_semantics=("parallel", "parallel"),
            vmem_limit_bytes=int(vmem_limit),
        ),
        cost_estimate=pl.CostEstimate(
            flops=flops, transcendentals=0, bytes_accessed=int(bytes_accessed)),
    )(x3, w_arg, b_arg)

    return out3.reshape(N, C_out, H, W)


def reference_outconv(x_nchw, weight, bias):
    # Pure-JAX reference (same math as nn.Conv2d with kernel_size=1).
    w_mat = weight.reshape(weight.shape[0], weight.shape[1])  # (C_out, C_in)
    return jnp.einsum("nchw,oc->nohw", x_nchw, w_mat) + bias[None, :, None, None]


if __name__ == "__main__":
    key = jax.random.PRNGKey(0)
    k_x, k_w, k_b = jax.random.split(key, 3)

    N, C_in, C_out, H, W = 2, 4, 3, 16, 16

    x = jax.random.normal(k_x, (N, C_in, H, W), dtype=jnp.float32)
    # Deterministic param init mimicking nn.Conv2d default (+-1/sqrt(fan_in)).
    bound = 1.0 / (C_in ** 0.5)
    weight = jax.random.uniform(k_w, (C_out, C_in, 1, 1), jnp.float32, -bound, bound)
    bias = jax.random.uniform(k_b, (C_out,), jnp.float32, -bound, bound)

    out = outconv_forward(x, weight, bias)
    out = jax.block_until_ready(out)

    ref = reference_outconv(x, weight, bias)
    assert out.shape == (N, C_out, H, W)
    assert jnp.allclose(out, ref, atol=1e-5, rtol=1e-5)

    print("KERNEL_OK")
</pallas_src>

<mosaic_0001>
module attributes {stable_mosaic.version = 11 : i64} {
  func.func @kernel(%arg0: i32, %arg1: i32, %arg2: memref<1x4x256xf32, #tpu.memory_space<vmem>>, %arg3: memref<3x4xf32, #tpu.memory_space<smem>>, %arg4: memref<3xf32, #tpu.memory_space<smem>>, %arg5: memref<1x3x256xf32, #tpu.memory_space<vmem>>) attributes {dimension_semantics = [#tpu.dimension_semantics<parallel>, #tpu.dimension_semantics<parallel>], iteration_bounds = array<i64: 2, 1>, scalar_prefetch = 0 : i64, scratch_operands = 0 : i64, tpu.core_type = #tpu.core_type<tc>, window_params = [{transform_indices = @transform_0, window_bounds = array<i64: 1, 4, 256>}, {transform_indices = @transform_1, window_bounds = array<i64: 3, 4>}, {transform_indices = @transform_2, window_bounds = array<i64: 3>}, {transform_indices = @transform_3, window_bounds = array<i64: 1, 3, 256>}]} {
    %c0 = arith.constant 0 : index
    %c0_0 = arith.constant 0 : index
    %c0_1 = arith.constant 0 : index
    %0 = vector.load %arg2[%c0, %c0_0, %c0_1] : memref<1x4x256xf32, #tpu.memory_space<vmem>>, vector<1x1x256xf32>
    %1 = vector.shape_cast %0 : vector<1x1x256xf32> to vector<1x256xf32>
    %c0_2 = arith.constant 0 : index
    %c1 = arith.constant 1 : index
    %c0_3 = arith.constant 0 : index
    %2 = vector.load %arg2[%c0_2, %c1, %c0_3] : memref<1x4x256xf32, #tpu.memory_space<vmem>>, vector<1x1x256xf32>
    %3 = vector.shape_cast %2 : vector<1x1x256xf32> to vector<1x256xf32>
    %c0_4 = arith.constant 0 : index
    %c2 = arith.constant 2 : index
    %c0_5 = arith.constant 0 : index
    %4 = vector.load %arg2[%c0_4, %c2, %c0_5] : memref<1x4x256xf32, #tpu.memory_space<vmem>>, vector<1x1x256xf32>
    %5 = vector.shape_cast %4 : vector<1x1x256xf32> to vector<1x256xf32>
    %c0_6 = arith.constant 0 : index
    %c3 = arith.constant 3 : index
    %c0_7 = arith.constant 0 : index
    %6 = vector.load %arg2[%c0_6, %c3, %c0_7] : memref<1x4x256xf32, #tpu.memory_space<vmem>>, vector<1x1x256xf32>
    %7 = vector.shape_cast %6 : vector<1x1x256xf32> to vector<1x256xf32>
    %c0_8 = arith.constant 0 : index
    %8 = memref.load %arg4[%c0_8] : memref<3xf32, #tpu.memory_space<smem>>
    %9 = vector.broadcast %8 : f32 to vector<1x256xf32>
    %c0_9 = arith.constant 0 : index
    %c0_10 = arith.constant 0 : index
    %10 = memref.load %arg3[%c0_9, %c0_10] : memref<3x4xf32, #tpu.memory_space<smem>>
    %11 = vector.broadcast %10 : f32 to vector<1x256xf32>
    %12 = arith.mulf %11, %1 : vector<1x256xf32>
    %13 = arith.addf %9, %12 : vector<1x256xf32>
    %c0_11 = arith.constant 0 : index
    %c1_12 = arith.constant 1 : index
    %14 = memref.load %arg3[%c0_11, %c1_12] : memref<3x4xf32, #tpu.memory_space<smem>>
    %15 = vector.broadcast %14 : f32 to vector<1x256xf32>
    %16 = arith.mulf %15, %3 : vector<1x256xf32>
    %17 = arith.addf %13, %16 : vector<1x256xf32>
    %c0_13 = arith.constant 0 : index
    %c2_14 = arith.constant 2 : index
    %18 = memref.load %arg3[%c0_13, %c2_14] : memref<3x4xf32, #tpu.memory_space<smem>>
    %19 = vector.broadcast %18 : f32 to vector<1x256xf32>
    %20 = arith.mulf %19, %5 : vector<1x256xf32>
    %21 = arith.addf %17, %20 : vector<1x256xf32>
    %c0_15 = arith.constant 0 : index
    %c3_16 = arith.constant 3 : index
    %22 = memref.load %arg3[%c0_15, %c3_16] : memref<3x4xf32, #tpu.memory_space<smem>>
    %23 = vector.broadcast %22 : f32 to vector<1x256xf32>
    %24 = arith.mulf %23, %7 : vector<1x256xf32>
    %25 = arith.addf %21, %24 : vector<1x256xf32>
    %c0_17 = arith.constant 0 : index
    %c0_18 = arith.constant 0 : index
    %c0_19 = arith.constant 0 : index
    %26 = vector.load %arg5[%c0_17, %c0_18, %c0_19] : memref<1x3x256xf32, #tpu.memory_space<vmem>>, vector<1x1x256xf32>
    %27 = vector.shape_cast %26 : vector<1x1x256xf32> to vector<1x256xf32>
    %28 = vector.shape_cast %25 : vector<1x256xf32> to vector<1x1x256xf32>
    tpu.vector_store %arg5[%c0_17, %c0_18, %c0_19], %28 {strides = array<i32>} : memref<1x3x256xf32, #tpu.memory_space<vmem>>, vector<1x1x256xf32>,
    %c1_20 = arith.constant 1 : index
    %29 = memref.load %arg4[%c1_20] : memref<3xf32, #tpu.memory_space<smem>>
    %30 = vector.broadcast %29 : f32 to vector<1x256xf32>
    %c1_21 = arith.constant 1 : index
    %c0_22 = arith.constant 0 : index
    %31 = memref.load %arg3[%c1_21, %c0_22] : memref<3x4xf32, #tpu.memory_space<smem>>
    %32 = vector.broadcast %31 : f32 to vector<1x256xf32>
    %33 = arith.mulf %32, %1 : vector<1x256xf32>
    %34 = arith.addf %30, %33 : vector<1x256xf32>
    %c1_23 = arith.constant 1 : index
    %c1_24 = arith.constant 1 : index
    %35 = memref.load %arg3[%c1_23, %c1_24] : memref<3x4xf32, #tpu.memory_space<smem>>
    %36 = vector.broadcast %35 : f32 to vector<1x256xf32>
    %37 = arith.mulf %36, %3 : vector<1x256xf32>
    %38 = arith.addf %34, %37 : vector<1x256xf32>
    %c1_25 = arith.constant 1 : index
    %c2_26 = arith.constant 2 : index
    %39 = memref.load %arg3[%c1_25, %c2_26] : memref<3x4xf32, #tpu.memory_space<smem>>
    %40 = vector.broadcast %39 : f32 to vector<1x256xf32>
    %41 = arith.mulf %40, %5 : vector<1x256xf32>
    %42 = arith.addf %38, %41 : vector<1x256xf32>
    %c1_27 = arith.constant 1 : index
    %c3_28 = arith.constant 3 : index
    %43 = memref.load %arg3[%c1_27, %c3_28] : memref<3x4xf32, #tpu.memory_space<smem>>
    %44 = vector.broadcast %43 : f32 to vector<1x256xf32>
    %45 = arith.mulf %44, %7 : vector<1x256xf32>
    %46 = arith.addf %42, %45 : vector<1x256xf32>
    %c0_29 = arith.constant 0 : index
    %c1_30 = arith.constant 1 : index
    %c0_31 = arith.constant 0 : index
    %47 = vector.load %arg5[%c0_29, %c1_30, %c0_31] : memref<1x3x256xf32, #tpu.memory_space<vmem>>, vector<1x1x256xf32>
    %48 = vector.shape_cast %47 : vector<1x1x256xf32> to vector<1x256xf32>
    %49 = vector.shape_cast %46 : vector<1x256xf32> to vector<1x1x256xf32>
    tpu.vector_store %arg5[%c0_29, %c1_30, %c0_31], %49 {strides = array<i32>} : memref<1x3x256xf32, #tpu.memory_space<vmem>>, vector<1x1x256xf32>,
    %c2_32 = arith.constant 2 : index
    %50 = memref.load %arg4[%c2_32] : memref<3xf32, #tpu.memory_space<smem>>
    %51 = vector.broadcast %50 : f32 to vector<1x256xf32>
    %c2_33 = arith.constant 2 : index
    %c0_34 = arith.constant 0 : index
    %52 = memref.load %arg3[%c2_33, %c0_34] : memref<3x4xf32, #tpu.memory_space<smem>>
    %53 = vector.broadcast %52 : f32 to vector<1x256xf32>
    %54 = arith.mulf %53, %1 : vector<1x256xf32>
    %55 = arith.addf %51, %54 : vector<1x256xf32>
    %c2_35 = arith.constant 2 : index
    %c1_36 = arith.constant 1 : index
    %56 = memref.load %arg3[%c2_35, %c1_36] : memref<3x4xf32, #tpu.memory_space<smem>>
    %57 = vector.broadcast %56 : f32 to vector<1x256xf32>
    %58 = arith.mulf %57, %3 : vector<1x256xf32>
    %59 = arith.addf %55, %58 : vector<1x256xf32>
    %c2_37 = arith.constant 2 : index
    %c2_38 = arith.constant 2 : index
    %60 = memref.load %arg3[%c2_37, %c2_38] : memref<3x4xf32, #tpu.memory_space<smem>>
    %61 = vector.broadcast %60 : f32 to vector<1x256xf32>
    %62 = arith.mulf %61, %5 : vector<1x256xf32>
    %63 = arith.addf %59, %62 : vector<1x256xf32>
    %c2_39 = arith.constant 2 : index
    %c3_40 = arith.constant 3 : index
    %64 = memref.load %arg3[%c2_39, %c3_40] : memref<3x4xf32, #tpu.memory_space<smem>>
    %65 = vector.broadcast %64 : f32 to vector<1x256xf32>
    %66 = arith.mulf %65, %7 : vector<1x256xf32>
    %67 = arith.addf %63, %66 : vector<1x256xf32>
    %c0_41 = arith.constant 0 : index
    %c2_42 = arith.constant 2 : index
    %c0_43 = arith.constant 0 : index
    %68 = vector.load %arg5[%c0_41, %c2_42, %c0_43] : memref<1x3x256xf32, #tpu.memory_space<vmem>>, vector<1x1x256xf32>
    %69 = vector.shape_cast %68 : vector<1x1x256xf32> to vector<1x256xf32>
    %70 = vector.shape_cast %67 : vector<1x256xf32> to vector<1x1x256xf32>
    tpu.vector_store %arg5[%c0_41, %c2_42, %c0_43], %70 {strides = array<i32>} : memref<1x3x256xf32, #tpu.memory_space<vmem>>, vector<1x1x256xf32>,
    return
  }
  func.func @transform_0(%arg0: i32, %arg1: i32) -> (i32, i32, i32) {
    %c0_i32 = arith.constant 0 : i32
    %c0_i32_0 = arith.constant 0 : i32
    return %arg0, %c0_i32, %arg1 : i32, i32, i32
  }
  func.func @transform_1(%arg0: i32, %arg1: i32) -> (i32, i32) {
    %c0_i32 = arith.constant 0 : i32
    %c0_i32_0 = arith.constant 0 : i32
    %c0_i32_1 = arith.constant 0 : i32
    return %c0_i32, %c0_i32_0 : i32, i32
  }
  func.func @transform_2(%arg0: i32, %arg1: i32) -> i32 {
    %c0_i32 = arith.constant 0 : i32
    %c0_i32_0 = arith.constant 0 : i32
    return %c0_i32 : i32
  }
  func.func @transform_3(%arg0: i32, %arg1: i32) -> (i32, i32, i32) {
    %c0_i32 = arith.constant 0 : i32
    %c0_i32_0 = arith.constant 0 : i32
    return %arg0, %c0_i32, %arg1 : i32, i32, i32
  }
}

</mosaic_0001>

<llo_original>
// kernel: tpu_custom_call.1
$region0: #{tpu_custom_call.1}
  #allocation0 [shape = 'u32[]', space=smem, size = 0x4, offset = 0x4, fixed_abs, tag = 'smem constant byte address 0x4 - core index']
  #allocation1 [shape = 'u32[144,128]{1,0:T(1,128)}', space=vmem, size = 0x12000, scoped, tag = 'internal scratch']
  %s0 = inlined_call_operand.hbm [shape: f32[2,4,256], index: 0, kind: input, shape index: {}]
  %s1 = inlined_call_operand.hbm [shape: f32[3,4], index: 1, kind: input, shape index: {}]
  %s2 = inlined_call_operand.vmem [shape: f32[3], index: 2, kind: input, shape index: {}]
  %s3 = inlined_call_operand.vmem [shape: f32[2,3,256], index: 3, kind: output, shape index: {}]
  %s4 = sld [smem:[#allocation0]]
  $region57: #{tpu_custom_call.1} parent=0
    _
  %s6 = ssub.s32 1, %s4
  %s7 = scalar_select 0, %s6, %s4
  $region1: #{tpu_custom_call.1} parent=0
    #allocation2 [shape = 'u8[8192]{0}', space=vmem, size = 0x2000, scoped, tag = 'input window, operand 0']
    #allocation3 [shape = 's32[2]{0}', space=sflag, size = 0x8, scoped, tag = 'scoped memory for tpu_custom_call.1']
    #allocation4 [shape = 's32[2]{0}', space=sflag, size = 0x8, scoped, tag = 'scoped memory for tpu_custom_call.1']
    #allocation5 [shape = 's32[2]{0}', space=sflag, size = 0x8, scoped, tag = 'scoped memory for tpu_custom_call.1']
    #allocation6 [shape = 'u8[2048]{0}', space=smem, size = 0x800, scoped, tag = 'input window, operand 1, single buffered']
    #allocation7 [shape = 'u8[512]{0}', space=smem, size = 0x200, scoped, tag = 'input window, operand 2, single buffered']
    %8 = vsyncpa [#allocation3], 0
    %s9 = scalar_lea.sflag [#allocation3], 1
    %10 = vsyncpa %s9, 0
    %11 = vsyncpa [#allocation4], 0
    %12 = vsyncpa [#allocation5], 0
    loop: start=0, step=1, limit=4
    $region2: #{tpu_custom_call.1} parent=1 // loop_pre_header
      _
    $region3: #{tpu_custom_call.1} parent=1 // loop_header
      %s14 = sphi 0, %s18
      %p15 = scmp.ge.s32.totalorder %s14, 4
      %s21 = sphi 0, %s33
      %s22 = sphi 0, %s29
      %s23 = sphi 0, %s21
      %s24 = sphi 0, %s22
      %s25 = sphi 0, %s23
      %s26 = sphi 0, %s24
      %s38 = sphi 0, %s40
      %s41 = sphi 0, %s38
      %s42 = sphi 0, %s41
      %s58 = sphi 0, %s42
      %s62 = sphi 0, %s62
      %s64 = sphi 0, %s62
      %s65 = sphi 0, %s64
      %s79 = sphi 0, %s65
      %s83 = sphi 0, %s83
      %s85 = sphi 0, %s83
      %s86 = sphi 0, %s85
      %s100 = sphi 0, %s86
      %s108 = sphi 0, %s110
      %s111 = sphi 0, %s108
      %s112 = sphi 0, %s111
      %s128 = sphi 0, %s112
    $region4: #{tpu_custom_call.1} parent=1 // loop_header_branch
      %17 = sbr.rel (%p15) target = $region8
    $region5: #{tpu_custom_call.1} parent=1 // loop_body
      %s19 = ssub.s32 %s14, 1
      %s20 = ssub.s32 %s14, 2
      %s27 = sadd.s32 1, %s22
      %p28 = scmp.ge.s32.totalorder %s27, 1
      %s29 = scalar_select %p28, 0, %s27
      %s30 = sadd.s32 1, %s21
      %s31 = scalar_select %p28, %s30, %s21
      %p32 = scmp.ge.s32.totalorder %s31, 2
      %s33 = scalar_select %p32, 0, %s31
      %s34 = ssub.s32 %s21, %s33
      %s35 = ssub.s32 %s22, %s29
      %s36 = sor.u32 %s34, %s35
      %p37 = scmp.eq.s32.totalorder %s36, 0
      %s39 = sadd.s32 %s38, 1
      %s40 = scalar_select %p37, %s38, %s39
      %p43 = pneg %p37
      %p44 = scmp.eq.s32.totalorder %s14, 1
      %p45 = por %p43, %p44
      %p46 = scmp.ne.s32.totalorder %s38, %s41
      %p47 = scmp.eq.s32.totalorder %s14, 0
      %p48 = por %p46, %p47
      %p49 = scmp.ne.s32.totalorder %s38, %s41
      %p50 = scmp.eq.s32.totalorder %s19, 1
      %p51 = por %p49, %p50
      %p52 = scmp.ne.s32.totalorder %s41, %s42
      %p53 = scmp.eq.s32.totalorder %s19, 0
      %p54 = por %p52, %p53
      %p55 = scmp.ne.s32.totalorder %s41, %s42
      %p56 = scmp.eq.s32.totalorder %s20, 1
      %p57 = por %p55, %p56
      %p59 = scmp.ne.s32.totalorder %s42, %s58
      %p60 = scmp.eq.s32.totalorder %s20, 0
      %p61 = por %p59, %p60
      %s63 = sadd.s32 %s62, 1
      %p66 = scmp.eq.s32.totalorder %s14, 1
      %p67 = scmp.ne.s32.totalorder %s62, %s64
      %p68 = scmp.eq.s32.totalorder %s14, 0
      %p69 = por %p67, %p68
      %p70 = scmp.ne.s32.totalorder %s62, %s64
      %p71 = scmp.eq.s32.totalorder %s19, 1
      %p72 = por %p70, %p71
      %p73 = scmp.ne.s32.totalorder %s64, %s65
      %p74 = scmp.eq.s32.totalorder %s19, 0
      %p75 = por %p73, %p74
      %p76 = scmp.ne.s32.totalorder %s64, %s65
      %p77 = scmp.eq.s32.totalorder %s20, 1
      %p78 = por %p76, %p77
      %p80 = scmp.ne.s32.totalorder %s65, %s79
      %p81 = scmp.eq.s32.totalorder %s20, 0
      %p82 = por %p80, %p81
      %s84 = sadd.s32 %s83, 1
      %p87 = scmp.eq.s32.totalorder %s14, 1
      %p88 = scmp.ne.s32.totalorder %s83, %s85
      %p89 = scmp.eq.s32.totalorder %s14, 0
      %p90 = por %p88, %p89
      %p91 = scmp.ne.s32.totalorder %s83, %s85
      %p92 = scmp.eq.s32.totalorder %s19, 1
      %p93 = por %p91, %p92
      %p94 = scmp.ne.s32.totalorder %s85, %s86
      %p95 = scmp.eq.s32.totalorder %s19, 0
      %p96 = por %p94, %p95
      %p97 = scmp.ne.s32.totalorder %s85, %s86
      %p98 = scmp.eq.s32.totalorder %s20, 1
      %p99 = por %p97, %p98
      %p101 = scmp.ne.s32.totalorder %s86, %s100
      %p102 = scmp.eq.s32.totalorder %s20, 0
      %p103 = por %p101, %p102
      %s104 = ssub.s32 %s21, %s33
      %s105 = ssub.s32 %s22, %s29
      %s106 = sor.u32 %s104, %s105
      %p107 = scmp.eq.s32.totalorder %s106, 0
      %s109 = sadd.s32 %s108, 1
      %s110 = scalar_select %p107, %s108, %s109
      %p113 = pneg %p107
      %p114 = scmp.eq.s32.totalorder %s14, 1
      %p115 = por %p113, %p114
      %p116 = scmp.ne.s32.totalorder %s108, %s111
      %p117 = scmp.eq.s32.totalorder %s14, 0
      %p118 = por %p116, %p117
      %p119 = scmp.ne.s32.totalorder %s108, %s111
      %p120 = scmp.eq.s32.totalorder %s19, 1
      %p121 = por %p119, %p120
      %p122 = scmp.ne.s32.totalorder %s111, %s112
      %p123 = scmp.eq.s32.totalorder %s19, 0
      %p124 = por %p122, %p123
      %p125 = scmp.ne.s32.totalorder %s111, %s112
      %p126 = scmp.eq.s32.totalorder %s20, 1
      %p127 = por %p125, %p126
      %p129 = scmp.ne.s32.totalorder %s112, %s128
      %p130 = scmp.eq.s32.totalorder %s20, 0
      %p131 = por %p129, %p130
      %p132 = scmp.le.s32.totalorder 1, %s14
      %p133 = scmp.lt.s32.totalorder %s14, 3
      %p134 = pnand %p132, %p133
      %p135 = pneg %p134
      // Predicated region
      $region9: #{tpu_custom_call.1} parent=5 // pred_check
        _
      $region10: #{tpu_custom_call.1} parent=5 // pred_check_branch
        %137 = sbr.rel (%p134) target = $region12
      $region11: #{tpu_custom_call.1} parent=5 // pred_region
        %s138 = ssub.s32 %s14, 1
        // Predicated region
        $region13: #{tpu_custom_call.1} parent=11 // pred_check
          %p139 = pneg %p75
        $region14: #{tpu_custom_call.1} parent=11 // pred_check_branch
          %141 = sbr.rel (%p139) target = $region16
        $region15: #{tpu_custom_call.1} parent=11 // pred_region
          %s143 = ssub.s32 64, 64
          %144 = vsyncadd [#allocation4], %s143
          %147 = dma.hbm_to_smem %s1, 64, [#allocation6], [#allocation4]
        $region16: #{tpu_custom_call.1} parent=11 // pred_fallthru
          _
        // Predicated region
        $region17: #{tpu_custom_call.1} parent=11 // pred_check
          %p148 = pneg %p96
        $region18: #{tpu_custom_call.1} parent=11 // pred_check_branch
          %150 = sbr.rel (%p148) target = $region20
        $region19: #{tpu_custom_call.1} parent=11 // pred_region
          %s152 = ssub.s32 16, 16
          %153 = vsyncadd [#allocation5], %s152
          %s155 = sshll.u32 %s2, 4
          %s156 = int_to_ptr.vmem [resolvable:$true] %s155
          %158 = dma.vmem_to_smem %s156, 16, [#allocation7], [#allocation5]
        $region20: #{tpu_custom_call.1} parent=11 // pred_fallthru
          _
      $region12: #{tpu_custom_call.1} parent=5 // pred_fallthru
        _
      %p159 = scmp.lt.s32.totalorder %s14, 2
      // Predicated region
      $region21: #{tpu_custom_call.1} parent=5 // pred_check
        %p160 = pneg %p159
      $region22: #{tpu_custom_call.1} parent=5 // pred_check_branch
        %162 = sbr.rel (%p160) target = $region24
      $region23: #{tpu_custom_call.1} parent=5 // pred_region
        // Predicated region
        $region25: #{tpu_custom_call.1} parent=23 // pred_check
          %p163 = pneg %p48
        $region26: #{tpu_custom_call.1} parent=23 // pred_check_branch
          %165 = sbr.rel (%p163) target = $region28
        $region27: #{tpu_custom_call.1} parent=23 // pred_region
          %s166 = sand.u32 %s38, 1
          %s167 = scalar_lea.sflag [#allocation3], %s166
          %s168 = sand.u32 %s38, 1
          %s169 = smul.addr %s168, 8
          %s170 = scalar_lea.vmem [#allocation2], %s169
          %s171 = smul.u32 2, %s22
          %s173 = ssub.s32 128, 128
          %174 = vsyncadd %s167, %s173
          %s175 = smul.addr %s21, 2
          %s176 = sadd.s32 %s171, %s175
          %s177 = smul.addr %s176, 64
          %s178 = scalar_lea.hbm %s0, %s177
          %s180 = sshll.u32 %s170, 4
          %s181 = int_to_ptr.vmem [resolvable:$true] %s180
          %183 = dma.hbm_to_vmem [thread:$0]  %s178, 128, %s181, %s167
        $region28: #{tpu_custom_call.1} parent=23 // pred_fallthru
          _
      $region24: #{tpu_custom_call.1} parent=5 // pred_fallthru
        _
      %p184 = scmp.le.s32.totalorder 1, %s14
      %p185 = scmp.lt.s32.totalorder %s14, 3
      %p186 = pnand %p184, %p185
      %p187 = pneg %p186
      // Predicated region
      $region29: #{tpu_custom_call.1} parent=5 // pred_check
        _
      $region30: #{tpu_custom_call.1} parent=5 // pred_check_branch
        %189 = sbr.rel (%p186) target = $region32
      $region31: #{tpu_custom_call.1} parent=5 // pred_region
        %s190 = ssub.s32 %s14, 1
        %s191 = sand.u32 %s41, 1
        %s192 = scalar_lea.sflag [#allocation3], %s191
        %s193 = sand.u32 %s41, 1
        %s194 = smul.addr %s193, 8
        %s195 = scalar_lea.vmem [#allocation2], %s194
        // Predicated region
        $region33: #{tpu_custom_call.1} parent=31 // pred_check
          %p196 = pneg %p54
        $region34: #{tpu_custom_call.1} parent=31 // pred_check_branch
          %198 = sbr.rel (%p196) target = $region36
        $region35: #{tpu_custom_call.1} parent=31 // pred_region
          %199 = dma.done %s192, 128
        $region36: #{tpu_custom_call.1} parent=31 // pred_fallthru
          _
        // Predicated region
        $region37: #{tpu_custom_call.1} parent=31 // pred_check
          %p200 = pneg %p75
        $region38: #{tpu_custom_call.1} parent=31 // pred_check_branch
          %202 = sbr.rel (%p200) target = $region40
        $region39: #{tpu_custom_call.1} parent=31 // pred_region
          %203 = dma.done [#allocation4], 64
        $region40: #{tpu_custom_call.1} parent=31 // pred_fallthru
          _
        // Predicated region
        $region41: #{tpu_custom_call.1} parent=31 // pred_check
          %p204 = pneg %p96
        $region42: #{tpu_custom_call.1} parent=31 // pred_check_branch
          %206 = sbr.rel (%p204) target = $region44
        $region43: #{tpu_custom_call.1} parent=31 // pred_region
          %207 = dma.done [#allocation5], 16
        $region44: #{tpu_custom_call.1} parent=31 // pred_fallthru
          _
        %208 = sfence
        %s209 = sand.u32 %s41, 1
        %s210 = scalar_lea.sflag [#allocation3], %s209
        %s211 = sand.u32 %s41, 1
        %s212 = smul.addr %s211, 8
        %s213 = scalar_lea.vmem [#allocation2], %s212
        %p214 = pneg %p54
        %p215 = pneg %p51
        %p216 = pneg %p75
        %p217 = pneg %p72
        %p218 = pneg %p96
        %p219 = pneg %p93
        %p220 = pneg %p124
        %p221 = pneg %p121
        %s222 = smul.u32 2, %s24
        %p223 = scmp.lt.s32.totalorder %s23, 1
        %s224 = scalar_select %p223, %s23, 1
        %p225 = scmp.lt.s32.totalorder %s222, 1
        %s226 = scalar_select %p225, %s222, 1
        %s227 = smul.addr %s224, 2
        %s228 = sadd.s32 %s226, %s227
        %s229 = smul.addr %s228, 4
        %s230 = scalar_lea.vmem %s3, %s229
        %s231 = smul.u32 2, %s24
        %s232 = smul.u32 2, %s24
        %p233 = scmp.lt.s32.totalorder %s23, 1
        %s234 = scalar_select %p233, %s23, 1
        %p235 = scmp.lt.s32.totalorder %s232, 1
        %s236 = scalar_select %p235, %s232, 1
        %s237 = smul.addr %s234, 2
        %s238 = sadd.s32 %s236, %s237
        %s239 = smul.addr %s238, 4
        %s240 = scalar_lea.vmem %s3, %s239
        %s241 = smul.u32 2, %s24
        %v242 = vld [vmem:[%s195] ss:$4 sm:$0x3]
        %s243 = scalar_lea.vmem %s195, 1 [#allocation2]
        %v244 = vld [vmem:[%s243] ss:$4 sm:$0x3]
        %s245 = scalar_lea.vmem %s195, 2 [#allocation2]
        %v246 = vld [vmem:[%s245] ss:$4 sm:$0x3]
        %s247 = scalar_lea.vmem %s195, 3 [#allocation2]
        %v248 = vld [vmem:[%s247] ss:$4 sm:$0x3]
        %s249 = sld [smem:[#allocation7]]
        %v250 = vstv %s249
        %s251 = sld [smem:[#allocation6]]
        %v252 = vstv %s251
        %v253 = vmul.f32 %v252, %v242
        %v254 = vadd.f32 %v250, %v253
        %s255 = sld [smem:[#allocation6 + $0x1]]
        %v256 = vstv %s255
        %v257 = vmul.f32 %v256, %v244
        %v258 = vadd.f32 %v254, %v257
        %s259 = sld [smem:[#allocation6 + $0x2]]
        %v260 = vstv %s259
        %v261 = vmul.f32 %v260, %v246
        %v262 = vadd.f32 %v258, %v261
        %s263 = sld [smem:[#allocation6 + $0x3]]
        %v264 = vstv %s263
        %v265 = vmul.f32 %v264, %v248
        %v266 = vadd.f32 %v262, %v265
        %v267 = vlaneseq
        %vm268 = vcmp.ge.s32.totalorder %v267, 0
        %vm269 = vcmp.lt.s32.totalorder %v267, 256
        %vm270 = vmand %vm268, %vm269
        %271 = vst.msk [vmem:[%s240] ss:$4 sm:$0x3] %vm270, %v266
        %s272 = sld [smem:[#allocation7 + $0x1]]
        %v273 = vstv %s272
        %s274 = sld [smem:[#allocation6 + $0x80]]
        %v275 = vstv %s274
        %v276 = vmul.f32 %v275, %v242
        %v277 = vadd.f32 %v273, %v276
        %s278 = sld [smem:[#allocation6 + $0x81]]
        %v279 = vstv %s278
        %v280 = vmul.f32 %v279, %v244
        %v281 = vadd.f32 %v277, %v280
        %s282 = sld [smem:[#allocation6 + $0x82]]
        %v283 = vstv %s282
        %v284 = vmul.f32 %v283, %v246
        %v285 = vadd.f32 %v281, %v284
        %s286 = sld [smem:[#allocation6 + $0x83]]
        %v287 = vstv %s286
        %v288 = vmul.f32 %v287, %v248
        %v289 = vadd.f32 %v285, %v288
        %s290 = scalar_lea.vmem %s240, 1
        %291 = vst.msk [vmem:[%s290] ss:$4 sm:$0x3] %vm270, %v289
        %s292 = sld [smem:[#allocation7 + $0x2]]
        %v293 = vstv %s292
        %s294 = sld [smem:[#allocation6 + $0x100]]
        %v295 = vstv %s294
        %v296 = vmul.f32 %v295, %v242
        %v297 = vadd.f32 %v293, %v296
        %s298 = sld [smem:[#allocation6 + $0x101]]
        %v299 = vstv %s298
        %v300 = vmul.f32 %v299, %v244
        %v301 = vadd.f32 %v297, %v300
        %s302 = sld [smem:[#allocation6 + $0x102]]
        %v303 = vstv %s302
        %v304 = vmul.f32 %v303, %v246
        %v305 = vadd.f32 %v301, %v304
        %s306 = sld [smem:[#allocation6 + $0x103]]
        %v307 = vstv %s306
        %v308 = vmul.f32 %v307, %v248
        %v309 = vadd.f32 %v305, %v308
        %s310 = scalar_lea.vmem %s240, 2
        %311 = vst.msk [vmem:[%s310] ss:$4 sm:$0x3] %vm270, %v309
        %s312 = smul.u32 2, %s24
        %p313 = scmp.lt.s32.totalorder %s23, 1
        %s314 = scalar_select %p313, %s23, 1
        %p315 = scmp.lt.s32.totalorder %s312, 1
        %s316 = scalar_select %p315, %s312, 1
        %s317 = smul.addr %s314, 2
        %s318 = sadd.s32 %s316, %s317
        %s319 = smul.addr %s318, 4
        %s320 = scalar_lea.vmem %s3, %s319
        // Predicated region
        $region45: #{tpu_custom_call.1} parent=31 // pred_check
          %p321 = pneg %p121
        $region46: #{tpu_custom_call.1} parent=31 // pred_check_branch
          %323 = sbr.rel (%p321) target = $region48
        $region47: #{tpu_custom_call.1} parent=31 // pred_region
          %s324 = smul.u32 2, %s24
        $region48: #{tpu_custom_call.1} parent=31 // pred_fallthru
          _
      $region32: #{tpu_custom_call.1} parent=5 // pred_fallthru
        _
      %p325 = scmp.le.s32.totalorder 2, %s14
      // Predicated region
      $region49: #{tpu_custom_call.1} parent=5 // pred_check
        %p326 = pneg %p325
      $region50: #{tpu_custom_call.1} parent=5 // pred_check_branch
        %328 = sbr.rel (%p326) target = $region52
      $region51: #{tpu_custom_call.1} parent=5 // pred_region
        %s329 = ssub.s32 %s14, 2
        // Predicated region
        $region53: #{tpu_custom_call.1} parent=51 // pred_check
          %p330 = pneg %p127
        $region54: #{tpu_custom_call.1} parent=51 // pred_check_branch
          %332 = sbr.rel (%p330) target = $region56
        $region55: #{tpu_custom_call.1} parent=51 // pred_region
          %s333 = smul.u32 2, %s26
          %p334 = scmp.lt.s32.totalorder %s25, 1
          %s335 = scalar_select %p334, %s25, 1
          %p336 = scmp.lt.s32.totalorder %s333, 1
          %s337 = scalar_select %p336, %s333, 1
          %s338 = smul.addr %s335, 2
          %s339 = sadd.s32 %s337, %s338
          %s340 = smul.addr %s339, 4
          %s341 = scalar_lea.vmem %s3, %s340
        $region56: #{tpu_custom_call.1} parent=51 // pred_fallthru
          _
      $region52: #{tpu_custom_call.1} parent=5 // pred_fallthru
        _
    $region6: #{tpu_custom_call.1} parent=1 // loop_footer
      %s18 = sadd.s32 1, %s14
    $region7: #{tpu_custom_call.1} parent=1 // loop_footer_branch
      %13 = sbr.rel target = $region3
    $region8: #{tpu_custom_call.1} parent=1 // loop_exit
      _
    %342 = vsyncpa [#allocation3], 1
    %s343 = scalar_lea.sflag [#allocation3], 1
    %344 = vsyncpa %s343, 1
    %345 = vsyncpa [#allocation4], 1
    %s346 = scalar_lea.sflag [#allocation4], 1
    %347 = vsyncpa %s346, 1
    %348 = vsyncpa [#allocation5], 1
    %s349 = scalar_lea.sflag [#allocation5], 1
    %350 = vsyncpa %s349, 1

</llo_original>
